<compile_context>
chip_gen: v7x
topology: tpu7x:2x2x1
jax: 0.10.0
libtpu: 0.0.40
codegen_flags: <defaults>
</compile_context>

<pallas_src>
import functools

import jax
import jax.numpy as jnp
from jax.experimental import pallas as pl
from jax.experimental.pallas import tpu as pltpu


# ----------------------------------------------------------------------------
# Kernels
# ----------------------------------------------------------------------------
def _stacked_linear_kernel_packed(x_ref, w_ref, b_ref, o_ref, *, cb, out_dim):
    # x_ref: (cb, TB, D); w_ref: (cb, D, O); b_ref: (cb, 1, O); o_ref: (TB, cb*O)
    for c in range(cb):  # static unroll over the chunks fused into this step
        y = jnp.dot(x_ref[c], w_ref[c],
                    preferred_element_type=jnp.float32)        # (TB, O) f32 acc
        y = y + b_ref[c].astype(jnp.float32)                   # (1, O) broadcast
        # Store straight into this chunk's lane slice; result dies immediately.
        o_ref[:, c * out_dim:(c + 1) * out_dim] = y.astype(o_ref.dtype)


def _stacked_linear_kernel_direct(x_ref, w_ref, b_ref, o_ref, *, cb):
    # x_ref: (cb, TB, D); w_ref: (cb, D, O); b_ref: (cb, 1, O); o_ref: (cb, TB, O)
    for c in range(cb):
        y = jnp.dot(x_ref[c], w_ref[c],
                    preferred_element_type=jnp.float32)
        y = y + b_ref[c].astype(jnp.float32)
        o_ref[c] = y.astype(o_ref.dtype)


# ----------------------------------------------------------------------------
# Tiling / VMEM budgeting
# ----------------------------------------------------------------------------
def _vmem_limits():
    """(vmem_limit_bytes, per_step_block_budget_bytes) derived per generation."""
    cap = None
    try:
        cap = getattr(pltpu.get_tpu_info(), "vmem_capacity_bytes", None)
    except Exception:
        cap = None
    if not cap:
        cap = 64 * 1024 * 1024  # conservative fallback: v7x has 64 MiB / TC
    # Scoped-VMEM limit with headroom: ~48 MiB of 64 on v7x, 96 MiB of 128 on v5e/v6e.
    vmem_limit = min(int(cap * 3 // 4), 96 * 1024 * 1024)
    # Inputs + output are double-buffered by the BlockSpec pipeline, so keep
    # 2 * per-step-block-bytes comfortably under the limit.
    block_budget = vmem_limit // 3
    return vmem_limit, block_budget


def _choose_tiling(C, B, D, O, in_itemsize, out_itemsize, budget,
                   max_chunks_per_step, lane_pack_output):
    def block_bytes(cb, tb):
        in_bytes = (cb * tb * D + cb * D * O + cb * O) * in_itemsize
        out_bytes = tb * cb * O * out_itemsize
        return in_bytes + out_bytes

    # Batch tile: only shrink below B if a single chunk's blocks overflow the
    # budget; shrunk tiles stay multiples of 8 (sublane granularity).
    TB = B
    while TB > 8 and block_bytes(1, TB) > budget:
        new_tb = max(8, ((TB // 2) + 7) // 8 * 8)
        if new_tb == TB:
            break
        TB = new_tb

    # Chunks per step: largest fitting value, but keep >= 2 grid steps along
    # the chunk axis when C >= 2 (v7x megacore sharding + DMA/compute overlap).
    cb_cap = min(C, max_chunks_per_step)
    if C >= 2:
        cb_cap = min(cb_cap, max(1, C // 2))
    fitting = [c for c in range(1, cb_cap + 1) if block_bytes(c, TB) <= budget]
    if not fitting:
        return 1, TB
    best_fit = fitting[-1]
    # Prefer lane-dense (cb*O multiple of 128) packed writebacks if it costs
    # at most 2x the steps.
    if lane_pack_output:
        lane_ok = [c for c in fitting if (c * O) % 128 == 0]
        if lane_ok and lane_ok[-1] * 2 >= best_fit:
            return lane_ok[-1], TB
    # Prefer a divisor of C (no padding) unless it costs > 2x the steps.
    divs = [c for c in fitting if C % c == 0]
    best_div = divs[-1] if divs else 1
    cb = best_div if best_div * 2 >= best_fit else best_fit
    return cb, TB


# ----------------------------------------------------------------------------
# Forward wrapper
# ----------------------------------------------------------------------------
def stacked_reg_logit_forward(x, weights, biases, *, max_chunks_per_step=64,
                              compute_dtype=None, vmem_block_budget_bytes=None):
    """x: (C, B, D); weights: (C, O, D) (torch Linear layout); biases: (C, O).

    Returns (C, B, O) = stack_c( x[c] @ W[c].T + b[c] ).
    """
    C, B, D = x.shape
    O = weights.shape[1]
    assert weights.shape == (C, O, D) and biases.shape == (C, O)

    out_dtype = x.dtype

    # One-time weight layout prep: (C, O, D) -> (C, D, O) so the MXU RHS is
    # already in (K, N) orientation (no per-step in-VMEM RHS transpose).
    # TODO(synk): in a real model this transpose belongs at weight-prep time.
    w_t = jnp.swapaxes(weights, 1, 2)
    b3 = biases.reshape(C, 1, O)

    if compute_dtype is not None:
        x_in = x.astype(compute_dtype)
        w_in = w_t.astype(compute_dtype)
    else:
        x_in, w_in = x, w_t
    b_in = b3  # bias stays in its original (f32) dtype; added in f32 in-kernel

    in_itemsize = jnp.dtype(x_in.dtype).itemsize
    out_itemsize = jnp.dtype(out_dtype).itemsize

    vmem_limit, default_budget = _vmem_limits()
    budget = (vmem_block_budget_bytes if vmem_block_budget_bytes is not None
              else default_budget)

    use_direct = (O % 128 == 0)  # lane-dense natural layout -> skip packing
    cb, TB = _choose_tiling(C, B, D, O, in_itemsize, out_itemsize, budget,
                            max_chunks_per_step, lane_pack_output=not use_direct)

    G = -(-C // cb)
    NB = -(-B // TB)
    C_pad, B_pad = G * cb, NB * TB

    # Padding for non-divisor C / B (padded chunks produce garbage that is
    # sliced off below; they never contaminate real outputs).
    if C_pad != C or B_pad != B:
        x_in = jnp.pad(x_in, ((0, C_pad - C), (0, B_pad - B), (0, 0)))
    if C_pad != C:
        w_in = jnp.pad(w_in, ((0, C_pad - C), (0, 0), (0, 0)))
        b_in = jnp.pad(b_in, ((0, C_pad - C), (0, 0), (0, 0)))

    in_specs = [
        pl.BlockSpec((cb, TB, D), lambda g, b: (g, b, 0)),   # x    (native)
        pl.BlockSpec((cb, D, O), lambda g, b: (g, 0, 0)),    # W^T  (K, N)
        pl.BlockSpec((cb, 1, O), lambda g, b: (g, 0, 0)),    # bias
    ]
    cparams = pltpu.CompilerParams(
        # Both grid axes independent -> shard across the 2 TensorCores on v7x.
        dimension_semantics=("parallel", "parallel"),
        vmem_limit_bytes=vmem_limit,
    )
    cost = pl.CostEstimate(
        flops=2 * C * B * O * D,
        transcendentals=0,
        bytes_accessed=(C * B * D + C * D * O + C * O) * in_itemsize
                       + C * B * O * out_itemsize,
    )

    if use_direct:
        # O is already a multiple of 128: write the natural (C, B, O) layout,
        # no post-kernel reshape/transpose pass over the output.
        out = pl.pallas_call(
            functools.partial(_stacked_linear_kernel_direct, cb=cb),
            out_shape=jax.ShapeDtypeStruct((C_pad, B_pad, O), out_dtype),
            grid_spec=pltpu.PrefetchScalarGridSpec(
                num_scalar_prefetch=0,
                grid=(G, NB),
                in_specs=in_specs,
                out_specs=pl.BlockSpec((cb, TB, O), lambda g, b: (g, b, 0)),
            ),
            compiler_params=cparams,
            cost_estimate=cost,
        )(x_in, w_in, b_in)
        return out[:C, :B, :]

    # Small O: pack cb chunk results along lanes into one (TB, cb*O) slab per
    # step; the cheap layout fix-up back to (C, B, O) runs on the small output.
    out = pl.pallas_call(
        functools.partial(_stacked_linear_kernel_packed, cb=cb, out_dim=O),
        out_shape=jax.ShapeDtypeStruct((G, B_pad, cb * O), out_dtype),
        grid_spec=pltpu.PrefetchScalarGridSpec(
            num_scalar_prefetch=0,
            grid=(G, NB),
            in_specs=in_specs,
            out_specs=pl.BlockSpec((pl.Squeezed(), TB, cb * O),
                                   lambda g, b: (g, b, 0)),
        ),
        compiler_params=cparams,
        cost_estimate=cost,
    )(x_in, w_in, b_in)
    y = out.reshape(G, B_pad, cb, O).transpose(0, 2, 1, 3).reshape(C_pad, B_pad, O)
    return y[:C, :B, :]


# ----------------------------------------------------------------------------
# Demo / self-check
# ----------------------------------------------------------------------------
def _reference_forward(x, weights, biases):
    # Same math as torch: x[c] @ W[c].T + b[c].
    return jnp.einsum("cbd,cod->cbo", x, weights) + biases[:, None, :]


def _make_inputs(key, C, B, D, O):
    kx, kw, kb = jax.random.split(key, 3)
    bound = 1.0 / (D ** 0.5)
    x = jax.random.normal(kx, (C, B, D), dtype=jnp.float32)
    w = jax.random.uniform(kw, (C, O, D), jnp.float32, minval=-bound, maxval=bound)
    b = jax.random.uniform(kb, (C, O), jnp.float32, minval=-bound, maxval=bound)
    return x, w, b


if __name__ == "__main__":
    # 1) Small shapes consistent with the module: packed-output path,
    #    2 chunks/step -> grid (2, 1) (>= 2 steps for megacore/pipelining).
    C, B, D, O = 4, 8, 32, 8
    x, w, b = _make_inputs(jax.random.PRNGKey(0), C, B, D, O)
    y_ref = _reference_forward(x, w, b)
    y = jax.block_until_ready(stacked_reg_logit_forward(x, w, b))
    assert y.shape == (C, B, O)
    assert jnp.allclose(y, y_ref, atol=1e-5, rtol=1e-5)

    # 2) Multi-step chunk pipeline: 1 chunk per step -> grid (4, 1).
    y1 = jax.block_until_ready(
        stacked_reg_logit_forward(x, w, b, max_chunks_per_step=1))
    assert jnp.allclose(y1, y_ref, atol=1e-5, rtol=1e-5)

    # 3) bf16 x/W at the call boundary, f32 MXU accumulation.
    yb = jax.block_until_ready(
        stacked_reg_logit_forward(x, w, b, compute_dtype=jnp.bfloat16))
    assert jnp.allclose(yb, y_ref, atol=5e-2, rtol=5e-2)

    # 4) Lane-dense direct path (O multiple of 128): no post-kernel transpose.
    x2, w2, b2 = _make_inputs(jax.random.PRNGKey(1), 4, 8, 32, 128)
    y2 = jax.block_until_ready(stacked_reg_logit_forward(x2, w2, b2))
    assert jnp.allclose(y2, _reference_forward(x2, w2, b2), atol=1e-5, rtol=1e-5)

    # 5) Non-divisor C (padding path): C=7 with 3 chunks/step -> C_pad=9, grid (3, 1).
    x3, w3, b3 = _make_inputs(jax.random.PRNGKey(2), 7, 8, 32, 8)
    y3 = jax.block_until_ready(
        stacked_reg_logit_forward(x3, w3, b3, max_chunks_per_step=3))
    assert y3.shape == (7, 8, 8)
    assert jnp.allclose(y3, _reference_forward(x3, w3, b3), atol=1e-5, rtol=1e-5)

    # 6) Batch tiling: tiny block budget forces TB=8 over B=16 -> grid (4, 2).
    x4, w4, b4 = _make_inputs(jax.random.PRNGKey(3), 4, 16, 32, 8)
    y4 = jax.block_until_ready(
        stacked_reg_logit_forward(x4, w4, b4, vmem_block_budget_bytes=3072))
    assert jnp.allclose(y4, _reference_forward(x4, w4, b4), atol=1e-5, rtol=1e-5)

    # TODO(synk): forward_loss (BCEWithLogitsLoss + L2 reg) is not part of
    # forward(); only the forward pass is implemented as a kernel.
    print("KERNEL_OK")
</pallas_src>

<mosaic_0001>
module attributes {stable_mosaic.version = 11 : i64} {
  func.func @_stacked_linear_kernel_packed(%arg0: i32, %arg1: i32, %arg2: memref<2x8x32xf32, #tpu.memory_space<vmem>>, %arg3: memref<2x32x8xf32, #tpu.memory_space<vmem>>, %arg4: memref<2x1x8xf32, #tpu.memory_space<vmem>>, %arg5: memref<1x8x16xf32, #tpu.memory_space<vmem>>) attributes {dimension_semantics = [#tpu.dimension_semantics<parallel>, #tpu.dimension_semantics<parallel>], iteration_bounds = array<i64: 2, 1>, scalar_prefetch = 0 : i64, scratch_operands = 0 : i64, tpu.core_type = #tpu.core_type<tc>, window_params = [{transform_indices = @transform_0, window_bounds = array<i64: 2, 8, 32>}, {transform_indices = @transform_1, window_bounds = array<i64: 2, 32, 8>}, {transform_indices = @transform_2, window_bounds = array<i64: 2, 1, 8>}, {transform_indices = @transform_3, window_bounds = array<i64: 1, 8, 16>}]} {
    %c0 = arith.constant 0 : index
    %c0_0 = arith.constant 0 : index
    %c0_1 = arith.constant 0 : index
    %0 = vector.load %arg2[%c0, %c0_0, %c0_1] : memref<2x8x32xf32, #tpu.memory_space<vmem>>, vector<1x8x32xf32>
    %1 = vector.shape_cast %0 : vector<1x8x32xf32> to vector<8x32xf32>
    %c0_2 = arith.constant 0 : index
    %c0_3 = arith.constant 0 : index
    %c0_4 = arith.constant 0 : index
    %2 = vector.load %arg3[%c0_2, %c0_3, %c0_4] : memref<2x32x8xf32, #tpu.memory_space<vmem>>, vector<1x32x8xf32>
    %3 = vector.shape_cast %2 : vector<1x32x8xf32> to vector<32x8xf32>
    %cst = arith.constant dense<0.000000e+00> : vector<8x8xf32>
    %4 = tpu.matmul %1, %3, %cst {dimension_numbers = #tpu.dot_dimension_numbers<[1], [0], [0], [1], [0, 0, 1, 1], [], []>} : vector<8x32xf32>, vector<32x8xf32>, vector<8x8xf32> -> vector<8x8xf32>
    %c0_5 = arith.constant 0 : index
    %c0_6 = arith.constant 0 : index
    %c0_7 = arith.constant 0 : index
    %5 = vector.load %arg4[%c0_5, %c0_6, %c0_7] : memref<2x1x8xf32, #tpu.memory_space<vmem>>, vector<1x1x8xf32>
    %6 = vector.shape_cast %5 : vector<1x1x8xf32> to vector<1x8xf32>
    %7 = vector.broadcast %6 : vector<1x8xf32> to vector<8x8xf32>
    %8 = arith.addf %4, %7 : vector<8x8xf32>
    %c0_8 = arith.constant 0 : index
    %c0_9 = arith.constant 0 : index
    %c0_10 = arith.constant 0 : index
    %9 = vector.load %arg5[%c0_8, %c0_9, %c0_10] : memref<1x8x16xf32, #tpu.memory_space<vmem>>, vector<1x8x8xf32>
    %10 = vector.shape_cast %9 : vector<1x8x8xf32> to vector<8x8xf32>
    %11 = vector.shape_cast %8 : vector<8x8xf32> to vector<1x8x8xf32>
    tpu.vector_store %arg5[%c0_8, %c0_9, %c0_10], %11 {strides = array<i32>} : memref<1x8x16xf32, #tpu.memory_space<vmem>>, vector<1x8x8xf32>,
    %c1 = arith.constant 1 : index
    %c0_11 = arith.constant 0 : index
    %c0_12 = arith.constant 0 : index
    %12 = vector.load %arg2[%c1, %c0_11, %c0_12] : memref<2x8x32xf32, #tpu.memory_space<vmem>>, vector<1x8x32xf32>
    %13 = vector.shape_cast %12 : vector<1x8x32xf32> to vector<8x32xf32>
    %c1_13 = arith.constant 1 : index
    %c0_14 = arith.constant 0 : index
    %c0_15 = arith.constant 0 : index
    %14 = vector.load %arg3[%c1_13, %c0_14, %c0_15] : memref<2x32x8xf32, #tpu.memory_space<vmem>>, vector<1x32x8xf32>
    %15 = vector.shape_cast %14 : vector<1x32x8xf32> to vector<32x8xf32>
    %cst_16 = arith.constant dense<0.000000e+00> : vector<8x8xf32>
    %16 = tpu.matmul %13, %15, %cst_16 {dimension_numbers = #tpu.dot_dimension_numbers<[1], [0], [0], [1], [0, 0, 1, 1], [], []>} : vector<8x32xf32>, vector<32x8xf32>, vector<8x8xf32> -> vector<8x8xf32>
    %c1_17 = arith.constant 1 : index
    %c0_18 = arith.constant 0 : index
    %c0_19 = arith.constant 0 : index
    %17 = vector.load %arg4[%c1_17, %c0_18, %c0_19] : memref<2x1x8xf32, #tpu.memory_space<vmem>>, vector<1x1x8xf32>
    %18 = vector.shape_cast %17 : vector<1x1x8xf32> to vector<1x8xf32>
    %19 = vector.broadcast %18 : vector<1x8xf32> to vector<8x8xf32>
    %20 = arith.addf %16, %19 : vector<8x8xf32>
    %c0_20 = arith.constant 0 : index
    %c0_21 = arith.constant 0 : index
    %c8 = arith.constant 8 : index
    %21 = vector.load %arg5[%c0_20, %c0_21, %c8] : memref<1x8x16xf32, #tpu.memory_space<vmem>>, vector<1x8x8xf32>
    %22 = vector.shape_cast %21 : vector<1x8x8xf32> to vector<8x8xf32>
    %23 = vector.shape_cast %20 : vector<8x8xf32> to vector<1x8x8xf32>
    tpu.vector_store %arg5[%c0_20, %c0_21, %c8], %23 {strides = array<i32>} : memref<1x8x16xf32, #tpu.memory_space<vmem>>, vector<1x8x8xf32>,
    return
  }
  func.func @transform_0(%arg0: i32, %arg1: i32) -> (i32, i32, i32) {
    %c0_i32 = arith.constant 0 : i32
    %c0_i32_0 = arith.constant 0 : i32
    return %arg0, %arg1, %c0_i32 : i32, i32, i32
  }
  func.func @transform_1(%arg0: i32, %arg1: i32) -> (i32, i32, i32) {
    %c0_i32 = arith.constant 0 : i32
    %c0_i32_0 = arith.constant 0 : i32
    %c0_i32_1 = arith.constant 0 : i32
    return %arg0, %c0_i32, %c0_i32_0 : i32, i32, i32
  }
  func.func @transform_2(%arg0: i32, %arg1: i32) -> (i32, i32, i32) {
    %c0_i32 = arith.constant 0 : i32
    %c0_i32_0 = arith.constant 0 : i32
    %c0_i32_1 = arith.constant 0 : i32
    return %arg0, %c0_i32, %c0_i32_0 : i32, i32, i32
  }
  func.func @transform_3(%arg0: i32, %arg1: i32) -> (i32, i32, i32) {
    %c0_i32 = arith.constant 0 : i32
    %c0_i32_0 = arith.constant 0 : i32
    return %arg0, %arg1, %c0_i32 : i32, i32, i32
  }
}

</mosaic_0001>

<llo_original>
// kernel: tpu_custom_call.1
$region0: #{tpu_custom_call.1}
  #allocation0 [shape = 'u32[]', space=smem, size = 0x4, offset = 0x4, fixed_abs, tag = 'smem constant byte address 0x4 - core index']
  #allocation1 [shape = 'u32[144,128]{1,0:T(1,128)}', space=vmem, size = 0x12000, scoped, tag = 'internal scratch']
  %s0 = inlined_call_operand.vmem [shape: f32[4,8,32], index: 0, kind: input, shape index: {}]
  %s1 = inlined_call_operand.vmem [shape: f32[4,32,8], index: 1, kind: input, shape index: {}]
  %s2 = inlined_call_operand.vmem [shape: f32[4,1,8], index: 2, kind: input, shape index: {}]
  %s3 = inlined_call_operand.hbm [shape: f32[2,8,16], index: 3, kind: output, shape index: {}]
  %s4 = sld [smem:[#allocation0]]
  $region45: #{tpu_custom_call.1} parent=0
    _
  %s6 = ssub.s32 1, %s4
  %s7 = scalar_select 0, %s6, %s4
  $region1: #{tpu_custom_call.1} parent=0
    #allocation2 [shape = 'u8[8192]{0}', space=vmem, size = 0x2000, scoped, tag = 'output window, operand 0']
    #allocation3 [shape = 's32[2]{0}', space=sflag, size = 0x8, scoped, tag = 'scoped memory for tpu_custom_call.1']
    %8 = vsyncpa [#allocation3], 0
    %s9 = scalar_lea.sflag [#allocation3], 1
    %10 = vsyncpa %s9, 0
    loop: start=0, step=1, limit=4
    $region2: #{tpu_custom_call.1} parent=1 // loop_pre_header
      _
    $region3: #{tpu_custom_call.1} parent=1 // loop_header
      %s12 = sphi 0, %s16
      %p13 = scmp.ge.s32.totalorder %s12, 4
      %s19 = sphi 0, %s31
      %s20 = sphi 0, %s27
      %s21 = sphi 0, %s19
      %s22 = sphi 0, %s20
      %s23 = sphi 0, %s21
      %s24 = sphi 0, %s22
      %s36 = sphi 0, %s38
      %s39 = sphi 0, %s36
      %s40 = sphi 0, %s39
      %s56 = sphi 0, %s40
      %s62 = sphi 0, %s64
      %s65 = sphi 0, %s62
      %s66 = sphi 0, %s65
      %s82 = sphi 0, %s66
      %s88 = sphi 0, %s90
      %s91 = sphi 0, %s88
      %s92 = sphi 0, %s91
      %s108 = sphi 0, %s92
      %s116 = sphi 0, %s118
      %s119 = sphi 0, %s116
      %s120 = sphi 0, %s119
      %s136 = sphi 0, %s120
    $region4: #{tpu_custom_call.1} parent=1 // loop_header_branch
      %15 = sbr.rel (%p13) target = $region8
    $region5: #{tpu_custom_call.1} parent=1 // loop_body
      %s17 = ssub.s32 %s12, 1
      %s18 = ssub.s32 %s12, 2
      %s25 = sadd.s32 1, %s20
      %p26 = scmp.ge.s32.totalorder %s25, 1
      %s27 = scalar_select %p26, 0, %s25
      %s28 = sadd.s32 1, %s19
      %s29 = scalar_select %p26, %s28, %s19
      %p30 = scmp.ge.s32.totalorder %s29, 2
      %s31 = scalar_select %p30, 0, %s29
      %s32 = ssub.s32 %s19, %s31
      %s33 = ssub.s32 %s20, %s27
      %s34 = sor.u32 %s32, %s33
      %p35 = scmp.eq.s32.totalorder %s34, 0
      %s37 = sadd.s32 %s36, 1
      %s38 = scalar_select %p35, %s36, %s37
      %p41 = pneg %p35
      %p42 = scmp.eq.s32.totalorder %s12, 1
      %p43 = por %p41, %p42
      %p44 = scmp.ne.s32.totalorder %s36, %s39
      %p45 = scmp.eq.s32.totalorder %s12, 0
      %p46 = por %p44, %p45
      %p47 = scmp.ne.s32.totalorder %s36, %s39
      %p48 = scmp.eq.s32.totalorder %s17, 1
      %p49 = por %p47, %p48
      %p50 = scmp.ne.s32.totalorder %s39, %s40
      %p51 = scmp.eq.s32.totalorder %s17, 0
      %p52 = por %p50, %p51
      %p53 = scmp.ne.s32.totalorder %s39, %s40
      %p54 = scmp.eq.s32.totalorder %s18, 1
      %p55 = por %p53, %p54
      %p57 = scmp.ne.s32.totalorder %s40, %s56
      %p58 = scmp.eq.s32.totalorder %s18, 0
      %p59 = por %p57, %p58
      %s60 = ssub.s32 %s19, %s31
      %p61 = scmp.eq.s32.totalorder %s60, 0
      %s63 = sadd.s32 %s62, 1
      %s64 = scalar_select %p61, %s62, %s63
      %p67 = pneg %p61
      %p68 = scmp.eq.s32.totalorder %s12, 1
      %p69 = por %p67, %p68
      %p70 = scmp.ne.s32.totalorder %s62, %s65
      %p71 = scmp.eq.s32.totalorder %s12, 0
      %p72 = por %p70, %p71
      %p73 = scmp.ne.s32.totalorder %s62, %s65
      %p74 = scmp.eq.s32.totalorder %s17, 1
      %p75 = por %p73, %p74
      %p76 = scmp.ne.s32.totalorder %s65, %s66
      %p77 = scmp.eq.s32.totalorder %s17, 0
      %p78 = por %p76, %p77
      %p79 = scmp.ne.s32.totalorder %s65, %s66
      %p80 = scmp.eq.s32.totalorder %s18, 1
      %p81 = por %p79, %p80
      %p83 = scmp.ne.s32.totalorder %s66, %s82
      %p84 = scmp.eq.s32.totalorder %s18, 0
      %p85 = por %p83, %p84
      %s86 = ssub.s32 %s19, %s31
      %p87 = scmp.eq.s32.totalorder %s86, 0
      %s89 = sadd.s32 %s88, 1
      %s90 = scalar_select %p87, %s88, %s89
      %p93 = pneg %p87
      %p94 = scmp.eq.s32.totalorder %s12, 1
      %p95 = por %p93, %p94
      %p96 = scmp.ne.s32.totalorder %s88, %s91
      %p97 = scmp.eq.s32.totalorder %s12, 0
      %p98 = por %p96, %p97
      %p99 = scmp.ne.s32.totalorder %s88, %s91
      %p100 = scmp.eq.s32.totalorder %s17, 1
      %p101 = por %p99, %p100
      %p102 = scmp.ne.s32.totalorder %s91, %s92
      %p103 = scmp.eq.s32.totalorder %s17, 0
      %p104 = por %p102, %p103
      %p105 = scmp.ne.s32.totalorder %s91, %s92
      %p106 = scmp.eq.s32.totalorder %s18, 1
      %p107 = por %p105, %p106
      %p109 = scmp.ne.s32.totalorder %s92, %s108
      %p110 = scmp.eq.s32.totalorder %s18, 0
      %p111 = por %p109, %p110
      %s112 = ssub.s32 %s19, %s31
      %s113 = ssub.s32 %s20, %s27
      %s114 = sor.u32 %s112, %s113
      %p115 = scmp.eq.s32.totalorder %s114, 0
      %s117 = sadd.s32 %s116, 1
      %s118 = scalar_select %p115, %s116, %s117
      %p121 = pneg %p115
      %p122 = scmp.eq.s32.totalorder %s12, 1
      %p123 = por %p121, %p122
      %p124 = scmp.ne.s32.totalorder %s116, %s119
      %p125 = scmp.eq.s32.totalorder %s12, 0
      %p126 = por %p124, %p125
      %p127 = scmp.ne.s32.totalorder %s116, %s119
      %p128 = scmp.eq.s32.totalorder %s17, 1
      %p129 = por %p127, %p128
      %p130 = scmp.ne.s32.totalorder %s119, %s120
      %p131 = scmp.eq.s32.totalorder %s17, 0
      %p132 = por %p130, %p131
      %p133 = scmp.ne.s32.totalorder %s119, %s120
      %p134 = scmp.eq.s32.totalorder %s18, 1
      %p135 = por %p133, %p134
      %p137 = scmp.ne.s32.totalorder %s120, %s136
      %p138 = scmp.eq.s32.totalorder %s18, 0
      %p139 = por %p137, %p138
      %p140 = scmp.le.s32.totalorder 1, %s12
      %p141 = scmp.lt.s32.totalorder %s12, 3
      %p142 = pnand %p140, %p141
      %p143 = pneg %p142
      // Predicated region
      $region9: #{tpu_custom_call.1} parent=5 // pred_check
        _
      $region10: #{tpu_custom_call.1} parent=5 // pred_check_branch
        %145 = sbr.rel (%p142) target = $region12
      $region11: #{tpu_custom_call.1} parent=5 // pred_region
        %s146 = ssub.s32 %s12, 1
      $region12: #{tpu_custom_call.1} parent=5 // pred_fallthru
        _
      %p147 = scmp.lt.s32.totalorder %s12, 2
      // Predicated region
      $region13: #{tpu_custom_call.1} parent=5 // pred_check
        %p148 = pneg %p147
      $region14: #{tpu_custom_call.1} parent=5 // pred_check_branch
        %150 = sbr.rel (%p148) target = $region16
      $region15: #{tpu_custom_call.1} parent=5 // pred_region
        // Predicated region
        $region17: #{tpu_custom_call.1} parent=15 // pred_check
          %p151 = pneg %p46
        $region18: #{tpu_custom_call.1} parent=15 // pred_check_branch
          %153 = sbr.rel (%p151) target = $region20
        $region19: #{tpu_custom_call.1} parent=15 // pred_region
          %s154 = smul.u32 2, %s19
          %p155 = scmp.lt.s32.totalorder %s154, 3
          %s156 = scalar_select %p155, %s154, 3
          %p157 = scmp.lt.s32.totalorder %s20, 0
          %s158 = scalar_select %p157, %s20, 0
          %s159 = sadd.s32 %s158, %s156
          %s160 = smul.addr %s159, 8
          %s161 = scalar_lea.vmem %s0, %s160
          %s162 = smul.u32 2, %s19
        $region20: #{tpu_custom_call.1} parent=15 // pred_fallthru
          _
        // Predicated region
        $region21: #{tpu_custom_call.1} parent=15 // pred_check
          %p163 = pneg %p72
        $region22: #{tpu_custom_call.1} parent=15 // pred_check_branch
          %165 = sbr.rel (%p163) target = $region24
        $region23: #{tpu_custom_call.1} parent=15 // pred_region
          %s166 = smul.u32 2, %s19
          %p167 = scmp.lt.s32.totalorder %s166, 3
          %s168 = scalar_select %p167, %s166, 3
          %s169 = smul.addr %s168, 4
          %s170 = smul.addr %s169, 8
          %s171 = scalar_lea.vmem %s1, %s170
          %s172 = smul.u32 2, %s19
        $region24: #{tpu_custom_call.1} parent=15 // pred_fallthru
          _
        // Predicated region
        $region25: #{tpu_custom_call.1} parent=15 // pred_check
          %p173 = pneg %p98
        $region26: #{tpu_custom_call.1} parent=15 // pred_check_branch
          %175 = sbr.rel (%p173) target = $region28
        $region27: #{tpu_custom_call.1} parent=15 // pred_region
          %s176 = smul.u32 2, %s19
          %p177 = scmp.lt.s32.totalorder %s176, 3
          %s178 = scalar_select %p177, %s176, 3
          %s179 = scalar_lea.vmem %s2, %s178
          %s180 = smul.u32 2, %s19
        $region28: #{tpu_custom_call.1} parent=15 // pred_fallthru
          _
      $region16: #{tpu_custom_call.1} parent=5 // pred_fallthru
        _
      %p181 = scmp.le.s32.totalorder 1, %s12
      %p182 = scmp.lt.s32.totalorder %s12, 3
      %p183 = pnand %p181, %p182
      %p184 = pneg %p183
      // Predicated region
      $region29: #{tpu_custom_call.1} parent=5 // pred_check
        _
      $region30: #{tpu_custom_call.1} parent=5 // pred_check_branch
        %186 = sbr.rel (%p183) target = $region32
      $region31: #{tpu_custom_call.1} parent=5 // pred_region
        %s187 = ssub.s32 %s12, 1
        %s188 = smul.u32 2, %s21
        %p189 = scmp.lt.s32.totalorder %s188, 3
        %s190 = scalar_select %p189, %s188, 3
        %p191 = scmp.lt.s32.totalorder %s22, 0
        %s192 = scalar_select %p191, %s22, 0
        %s193 = sadd.s32 %s192, %s190
        %s194 = smul.addr %s193, 8
        %s195 = scalar_lea.vmem %s0, %s194
        %p196 = pneg %p52
        %p197 = pneg %p49
        %s198 = smul.u32 2, %s21
        %p199 = scmp.lt.s32.totalorder %s198, 3
        %s200 = scalar_select %p199, %s198, 3
        %s201 = smul.addr %s200, 4
        %s202 = smul.addr %s201, 8
        %s203 = scalar_lea.vmem %s1, %s202
        %p204 = pneg %p78
        %p205 = pneg %p75
        %s206 = smul.u32 2, %s21
        %p207 = scmp.lt.s32.totalorder %s206, 3
        %s208 = scalar_select %p207, %s206, 3
        %s209 = scalar_lea.vmem %s2, %s208
        %p210 = pneg %p104
        %p211 = pneg %p101
        %p212 = pneg %p132
        %p213 = pneg %p129
        %s214 = sand.u32 %s119, 1
        %s215 = scalar_lea.sflag [#allocation3], %s214
        %s216 = sand.u32 %s119, 1
        %s217 = smul.addr %s216, 8
        %s218 = scalar_lea.vmem [#allocation2], %s217
        %s219 = smul.u32 2, %s21
        %p220 = scmp.lt.s32.totalorder %s219, 3
        %s221 = scalar_select %p220, %s219, 3
        %p222 = scmp.lt.s32.totalorder %s22, 0
        %s223 = scalar_select %p222, %s22, 0
        %s224 = sadd.s32 %s223, %s221
        %s225 = smul.addr %s224, 8
        %s226 = scalar_lea.vmem %s0, %s225
        %s227 = smul.u32 2, %s21
        %s228 = smul.u32 2, %s21
        %p229 = scmp.lt.s32.totalorder %s228, 3
        %s230 = scalar_select %p229, %s228, 3
        %s231 = smul.addr %s230, 4
        %s232 = smul.addr %s231, 8
        %s233 = scalar_lea.vmem %s1, %s232
        %s234 = smul.u32 2, %s21
        %s235 = smul.u32 2, %s21
        %p236 = scmp.lt.s32.totalorder %s235, 3
        %s237 = scalar_select %p236, %s235, 3
        %s238 = scalar_lea.vmem %s2, %s237
        %s239 = smul.u32 2, %s21
        %v240 = vld [vmem:[%s226] sm:$0xff]
        %v241 = vld [vmem:[%s233] sm:$0xff]
        %v242 = vld [vmem:[%s233 + $0x8] sm:$0xff]
        %v243 = vld [vmem:[%s233 + $0x10] sm:$0xff]
        %v244 = vld [vmem:[%s233 + $0x18] sm:$0xff]
        %v245 = vld [vmem:[%s238] sm:$0x1]
        %v247 = vlaneseq
        %v248 = vshrl.u32 %v247, 7
        %v249 = vsub.s32 0, %v248
        %v250 = vrot.slane %v245, %v249
        %vm252 = vcmask 261120
        %v254 = vsel %vm252, %v240, 0
        %256 = vmatprep.subr.mxu0 0.0
        %257 = vmatpush1.msra.mxu0 %v241
        %258 = vmatprep.subr.mxu0 0.0
        %259 = vmatpush1.msra.mxu0 %v242
        %260 = vmatprep.subr.mxu0 0.0
        %261 = vmatpush1.msra.mxu0 %v243
        %262 = vmatprep.subr.mxu0 0.0
        %263 = vmatpush1.msra.mxu0 %v244
        %264 = vmatprep.subr.mxu0 0.0
        %265 = vmatpush1.msra.mxu0 0.0
        %266 = vmatprep.subr.mxu0 0.0
        %267 = vmatpush1.msra.mxu0 0.0
        %268 = vmatprep.subr.mxu0 0.0
        %269 = vmatpush1.msra.mxu0 0.0
        %270 = vmatprep.subr.mxu0 0.0
        %271 = vmatpush1.msra.mxu0 0.0
        %272 = vmatprep.subr.mxu0 0.0
        %273 = vmatpush1.msra.mxu0 0.0
        %274 = vmatprep.subr.mxu0 0.0
        %275 = vmatpush1.msra.mxu0 0.0
        %276 = vmatprep.subr.mxu0 0.0
        %277 = vmatpush1.msra.mxu0 0.0
        %278 = vmatprep.subr.mxu0 0.0
        %279 = vmatpush1.msra.mxu0 0.0
        %280 = vmatprep.subr.mxu0 0.0
        %281 = vmatpush1.msra.mxu0 0.0
        %282 = vmatprep.subr.mxu0 0.0
        %283 = vmatpush1.msra.mxu0 0.0
        %284 = vmatprep.subr.mxu0 0.0
        %285 = vmatpush1.msra.mxu0 0.0
        %286 = vmatprep.subr.mxu0 0.0
        %287 = vmatpush1.msra.mxu0 0.0
        %288 = vmatprep.subr.mxu0 0.0
        %289 = vmatpush1.msra.mxu0 0.0
        %290 = vmatprep.subr.mxu0 0.0
        %291 = vmatpush1.msra.mxu0 0.0
        %292 = vmatprep.subr.mxu0 0.0
        %293 = vmatpush1.msra.mxu0 0.0
        %294 = vmatprep.subr.mxu0 0.0
        %295 = vmatpush1.msra.mxu0 0.0
        %296 = vmatprep.subr.mxu0 0.0
        %297 = vmatpush1.msra.mxu0 0.0
        %298 = vmatprep.subr.mxu0 0.0
        %299 = vmatpush1.msra.mxu0 0.0
        %300 = vmatprep.subr.mxu0 0.0
        %301 = vmatpush1.msra.mxu0 0.0
        %302 = vmatprep.subr.mxu0 0.0
        %303 = vmatpush1.msra.mxu0 0.0
        %304 = vmatprep.subr.mxu0 0.0
        %305 = vmatpush1.msra.mxu0 0.0
        %306 = vmatprep.subr.mxu0 0.0
        %307 = vmatpush1.msra.mxu0 0.0
        %308 = vmatprep.subr.mxu0 0.0
        %309 = vmatpush1.msra.mxu0 0.0
        %310 = vmatprep.subr.mxu0 0.0
        %311 = vmatpush1.msra.mxu0 0.0
        %312 = vmatprep.subr.mxu0 0.0
        %313 = vmatpush1.msra.mxu0 0.0
        %314 = vmatprep.subr.mxu0 0.0
        %315 = vmatpush1.msra.mxu0 0.0
        %316 = vmatprep.subr.mxu0 0.0
        %317 = vmatpush1.msra.mxu0 0.0
        %318 = vmatprep.subr.mxu0 0.0
        %319 = vmatpush1.msra.mxu0 0.0
        %320 = vmatprep.mubr.f32.mxu0 0.0
        %321 = vmatmul.mubr.f32.gmra.mrb[0].mxu0 %v254
        %v322 = vpop.f32.mrb[0].mxu0
        %v323 = vadd.f32 %v250, %v322
        %v324 = vpop.f32.mrb[0].mxu0
        %325 = vdwg.mxu0
        %vm326 = vcmask 64512
        %327 = vst.msk [vmem:[%s218] sm:$0xff] %vm326, %v323
        %s328 = scalar_lea.vmem %s226, 8
        %v329 = vld [vmem:[%s328] sm:$0xff]
        %s330 = scalar_lea.vmem %s233, 32
        %v331 = vld [vmem:[%s330] sm:$0xff]
        %v332 = vld [vmem:[%s330 + $0x8] sm:$0xff]
        %v333 = vld [vmem:[%s330 + $0x10] sm:$0xff]
        %v334 = vld [vmem:[%s330 + $0x18] sm:$0xff]
        %s335 = scalar_lea.vmem %s238, 1
        %v336 = vld [vmem:[%s335] sm:$0x1]
        %v338 = vlaneseq
        %v339 = vshrl.u32 %v338, 7
        %v340 = vsub.s32 0, %v339
        %v341 = vrot.slane %v336, %v340
        %v344 = vsel %vm252, %v329, 0
        %346 = vmatprep.subr.mxu0 0.0
        %347 = vmatpush1.msra.mxu0 %v331
        %348 = vmatprep.subr.mxu0 0.0
        %349 = vmatpush1.msra.mxu0 %v332
        %350 = vmatprep.subr.mxu0 0.0
        %351 = vmatpush1.msra.mxu0 %v333
        %352 = vmatprep.subr.mxu0 0.0
        %353 = vmatpush1.msra.mxu0 %v334
        %354 = vmatprep.subr.mxu0 0.0
        %355 = vmatpush1.msra.mxu0 0.0
        %356 = vmatprep.subr.mxu0 0.0
        %357 = vmatpush1.msra.mxu0 0.0
        %358 = vmatprep.subr.mxu0 0.0
        %359 = vmatpush1.msra.mxu0 0.0
        %360 = vmatprep.subr.mxu0 0.0
        %361 = vmatpush1.msra.mxu0 0.0
        %362 = vmatprep.subr.mxu0 0.0
        %363 = vmatpush1.msra.mxu0 0.0
        %364 = vmatprep.subr.mxu0 0.0
        %365 = vmatpush1.msra.mxu0 0.0
        %366 = vmatprep.subr.mxu0 0.0
        %367 = vmatpush1.msra.mxu0 0.0
        %368 = vmatprep.subr.mxu0 0.0
        %369 = vmatpush1.msra.mxu0 0.0
        %370 = vmatprep.subr.mxu0 0.0
        %371 = vmatpush1.msra.mxu0 0.0
        %372 = vmatprep.subr.mxu0 0.0
        %373 = vmatpush1.msra.mxu0 0.0
        %374 = vmatprep.subr.mxu0 0.0
        %375 = vmatpush1.msra.mxu0 0.0
        %376 = vmatprep.subr.mxu0 0.0
        %377 = vmatpush1.msra.mxu0 0.0
        %378 = vmatprep.subr.mxu0 0.0
        %379 = vmatpush1.msra.mxu0 0.0
        %380 = vmatprep.subr.mxu0 0.0
        %381 = vmatpush1.msra.mxu0 0.0
        %382 = vmatprep.subr.mxu0 0.0
        %383 = vmatpush1.msra.mxu0 0.0
        %384 = vmatprep.subr.mxu0 0.0
        %385 = vmatpush1.msra.mxu0 0.0
        %386 = vmatprep.subr.mxu0 0.0
        %387 = vmatpush1.msra.mxu0 0.0
        %388 = vmatprep.subr.mxu0 0.0
        %389 = vmatpush1.msra.mxu0 0.0
        %390 = vmatprep.subr.mxu0 0.0
        %391 = vmatpush1.msra.mxu0 0.0
        %392 = vmatprep.subr.mxu0 0.0
        %393 = vmatpush1.msra.mxu0 0.0
        %394 = vmatprep.subr.mxu0 0.0
        %395 = vmatpush1.msra.mxu0 0.0
        %396 = vmatprep.subr.mxu0 0.0
        %397 = vmatpush1.msra.mxu0 0.0
        %398 = vmatprep.subr.mxu0 0.0
        %399 = vmatpush1.msra.mxu0 0.0
        %400 = vmatprep.subr.mxu0 0.0
        %401 = vmatpush1.msra.mxu0 0.0
        %402 = vmatprep.subr.mxu0 0.0
        %403 = vmatpush1.msra.mxu0 0.0
        %404 = vmatprep.subr.mxu0 0.0
        %405 = vmatpush1.msra.mxu0 0.0
        %406 = vmatprep.subr.mxu0 0.0
        %407 = vmatpush1.msra.mxu0 0.0
        %408 = vmatprep.subr.mxu0 0.0
        %409 = vmatpush1.msra.mxu0 0.0
        %410 = vmatprep.mubr.f32.mxu0 0.0
        %411 = vmatmul.mubr.f32.gmra.mrb[0].mxu0 %v344
        %v412 = vpop.f32.mrb[0].mxu0
        %v413 = vadd.f32 %v341, %v412
        %v414 = vpop.f32.mrb[0].mxu0
        %415 = vdwg.mxu0
        %417 = vrot.lane.b32.xlu0 %v413, 8
        %v418 = vpop.permute.xlu0 %417
        %vm420 = vcmask 130112
        %421 = vst.msk [vmem:[%s218] sm:$0xff] %vm420, %v418
        %s422 = sand.u32 %s119, 1
        %s423 = scalar_lea.sflag [#allocation3], %s422
        %s424 = sand.u32 %s119, 1
        %s425 = smul.addr %s424, 8
        %s426 = scalar_lea.vmem [#allocation2], %s425
        // Predicated region
        $region33: #{tpu_custom_call.1} parent=31 // pred_check
          %p427 = pneg %p129
        $region34: #{tpu_custom_call.1} parent=31 // pred_check_branch
          %429 = sbr.rel (%p427) target = $region36
        $region35: #{tpu_custom_call.1} parent=31 // pred_region
          %s431 = ssub.s32 128, 128
          %432 = vsyncadd %s423, %s431
          %s433 = sadd.s32 %s22, %s21
          %s434 = smul.addr %s433, 128
          %s435 = scalar_lea.hbm %s3, %s434
          %s437 = sshll.u32 %s426, 4
          %s438 = int_to_ptr.vmem [resolvable:$true] %s437
          %440 = dma.vmem_to_hbm [thread:$0]  %s438, 128, %s435, %s423
        $region36: #{tpu_custom_call.1} parent=31 // pred_fallthru
          _
      $region32: #{tpu_custom_call.1} parent=5 // pred_fallthru
        _
      %p441 = scmp.le.s32.totalorder 2, %s12
      // Predicated region
      $region37: #{tpu_custom_call.1} parent=5 // pred_check
        %p442 = pneg %p441
      $region38: #{tpu_custom_call.1} parent=5 // pred_check_branch
        %444 = sbr.rel (%p442) target = $region40
      $region39: #{tpu_custom_call.1} parent=5 // pred_region
        %s445 = ssub.s32 %s12, 2
        // Predicated region
        $region41: #{tpu_custom_call.1} parent=39 // pred_check
          %p446 = pneg %p135
        $region42: #{tpu_custom_call.1} parent=39 // pred_check_branch
          %448 = sbr.rel (%p446) target = $region44
        $region43: #{tpu_custom_call.1} parent=39 // pred_region
          %s449 = sand.u32 %s120, 1
          %s450 = scalar_lea.sflag [#allocation3], %s449
          %s451 = sand.u32 %s120, 1
          %s452 = smul.addr %s451, 8
          %s453 = scalar_lea.vmem [#allocation2], %s452
          %454 = dma.done %s450, 128
        $region44: #{tpu_custom_call.1} parent=39 // pred_fallthru
          _
      $region40: #{tpu_custom_call.1} parent=5 // pred_fallthru
        _
    $region6: #{tpu_custom_call.1} parent=1 // loop_footer
      %s16 = sadd.s32 1, %s12
    $region7: #{tpu_custom_call.1} parent=1 // loop_footer_branch
      %11 = sbr.rel target = $region3
    $region8: #{tpu_custom_call.1} parent=1 // loop_exit
      _
    %455 = vsyncpa [#allocation3], 1
    %s456 = scalar_lea.sflag [#allocation3], 1
    %457 = vsyncpa %s456, 1

</llo_original>
